<compile_context>
chip_gen: v6e
topology: v6e:2x2x1
jax: 0.10.0
libtpu: 0.0.40
codegen_flags: <defaults>
</compile_context>

<pallas_src>
import functools

import jax
import jax.numpy as jnp
from jax.experimental import pallas as pl
from jax.experimental.pallas import tpu as pltpu

INPUT_DIM = 27
HIDDEN_DIM = 32
OUTPUT_DIM = 9
BN_EPS = 1e-5


# --------------------------------------------------------------------------
# Kernel A: accumulate BatchNorm statistics of h = W1 @ x^T over the batch,
# finalize folded scale/shift on the last grid step.
# --------------------------------------------------------------------------
def _bn_stats_kernel(xT_ref, w1_ref, gamma_ref, beta_ref,
                     scale_ref, shift_ref,
                     sum_ref, ssq_ref, *, inv_batch):
    b = pl.program_id(0)

    @pl.when(b == 0)
    def _init():
        sum_ref[...] = jnp.zeros_like(sum_ref)
        ssq_ref[...] = jnp.zeros_like(ssq_ref)

    # fc1 (bias omitted: it cancels exactly under training-mode BatchNorm).
    # [HIDDEN, IN] @ [IN, TB] -> [HIDDEN, TB]   (lane-dense in the batch tile)
    h = jnp.dot(w1_ref[...], xT_ref[...], preferred_element_type=jnp.float32)

    # Lane (batch-axis) reductions -> XLU, separate slot from the VPU.
    sum_ref[...] += jnp.sum(h, axis=1, keepdims=True)
    ssq_ref[...] += jnp.sum(h * h, axis=1, keepdims=True)

    @pl.when(b == pl.num_programs(0) - 1)
    def _finalize():
        mean = sum_ref[...] * inv_batch
        var = ssq_ref[...] * inv_batch - mean * mean      # biased batch variance
        scale = gamma_ref[...] * jax.lax.rsqrt(var + BN_EPS)   # EUP rsqrt
        scale_ref[...] = scale
        shift_ref[...] = beta_ref[...] - mean * scale


# --------------------------------------------------------------------------
# Kernel B: per-batch-tile forward with the precomputed folded BN scale/shift.
# --------------------------------------------------------------------------
def _forward_kernel(xT_ref, w1_ref, scale_ref, shift_ref, w2_ref, b2_ref,
                    oT_ref):
    # fc1 (bias omitted, see above): [HIDDEN, TB]
    h = jnp.dot(w1_ref[...], xT_ref[...], preferred_element_type=jnp.float32)
    # Fused BatchNorm (scale/shift) + ReLU: two elementwise sweeps total.
    a = jnp.maximum(h * scale_ref[...] + shift_ref[...], 0.0)
    # out: [OUT, HIDDEN] @ [HIDDEN, TB] + [OUT, 1]  -> lane-dense store.
    oT_ref[...] = (jnp.dot(w2_ref[...], a, preferred_element_type=jnp.float32)
                   + b2_ref[...]).astype(oT_ref.dtype)


# --------------------------------------------------------------------------
# Wrapper
# --------------------------------------------------------------------------
def stronger_meta_ann(x, params, *, block_b=128):
    """Forward pass. x: [B, INPUT_DIM] float32 -> [B, OUTPUT_DIM] float32."""
    B, in_dim = x.shape
    assert in_dim == INPUT_DIM

    if B % block_b != 0:
        # TODO(synk): masked ragged last tile; fall back to one full block.
        block_b = B
    nb = B // block_b

    w1 = params["w1"]          # [HIDDEN, IN]   (PyTorch fc1.weight layout)
    gamma = params["gamma"]    # [HIDDEN, 1]
    beta = params["beta"]      # [HIDDEN, 1]
    w2 = params["w2"]          # [OUT, HIDDEN]  (PyTorch out.weight layout)
    b2 = params["b2"]          # [OUT, 1]

    # Layout plumbing outside the kernels: batch on lanes.
    xT = x.T                   # [IN, B]

    full = lambda shape: pl.BlockSpec(shape, lambda b: (0, 0))
    x_spec = pl.BlockSpec((INPUT_DIM, block_b), lambda b: (0, b))

    # ---- Pass 1: batch statistics -> folded scale/shift ------------------
    scale, shift = pl.pallas_call(
        functools.partial(_bn_stats_kernel, inv_batch=float(1.0 / B)),
        out_shape=(jax.ShapeDtypeStruct((HIDDEN_DIM, 1), jnp.float32),
                   jax.ShapeDtypeStruct((HIDDEN_DIM, 1), jnp.float32)),
        grid_spec=pltpu.PrefetchScalarGridSpec(
            num_scalar_prefetch=0,
            grid=(nb,),
            in_specs=[x_spec,
                      full((HIDDEN_DIM, INPUT_DIM)),
                      full((HIDDEN_DIM, 1)),
                      full((HIDDEN_DIM, 1))],
            out_specs=[full((HIDDEN_DIM, 1)),
                       full((HIDDEN_DIM, 1))],
            scratch_shapes=[pltpu.VMEM((HIDDEN_DIM, 1), jnp.float32),
                            pltpu.VMEM((HIDDEN_DIM, 1), jnp.float32)]),
        compiler_params=pltpu.CompilerParams(
            dimension_semantics=("arbitrary",)),
    )(xT, w1, gamma, beta)

    # ---- Pass 2: normalize + ReLU + output projection ---------------------
    oT = pl.pallas_call(
        _forward_kernel,
        out_shape=jax.ShapeDtypeStruct((OUTPUT_DIM, B), jnp.float32),
        grid_spec=pltpu.PrefetchScalarGridSpec(
            num_scalar_prefetch=0,
            grid=(nb,),
            in_specs=[x_spec,
                      full((HIDDEN_DIM, INPUT_DIM)),
                      full((HIDDEN_DIM, 1)),
                      full((HIDDEN_DIM, 1)),
                      full((OUTPUT_DIM, HIDDEN_DIM)),
                      full((OUTPUT_DIM, 1))],
            out_specs=pl.BlockSpec((OUTPUT_DIM, block_b), lambda b: (0, b))),
        compiler_params=pltpu.CompilerParams(
            dimension_semantics=("parallel",)),
    )(xT, w1, scale, shift, w2, b2)

    return oT.T                # [B, OUT]


# --------------------------------------------------------------------------
# Parameters / reference
# --------------------------------------------------------------------------
def init_params(key):
    """Deterministic synthetic parameters matching the PyTorch module shapes."""
    k1, k2, k3, k4, k5, k6 = jax.random.split(key, 6)
    # fc1: Linear(27, 32) -> weight [out, in] as in PyTorch.
    w1 = jax.random.normal(k1, (HIDDEN_DIM, INPUT_DIM), jnp.float32) * 0.1
    b1 = jax.random.normal(k2, (HIDDEN_DIM,), jnp.float32) * 0.1  # reference only
    # bn1 affine (randomized so the check is non-trivial).
    gamma = 1.0 + 0.1 * jax.random.normal(k3, (HIDDEN_DIM, 1), jnp.float32)
    beta = 0.1 * jax.random.normal(k4, (HIDDEN_DIM, 1), jnp.float32)
    # out: Linear(32, 9) -> weight [out, in].
    w2 = jax.random.normal(k5, (OUTPUT_DIM, HIDDEN_DIM), jnp.float32) * 0.1
    b2 = jax.random.normal(k6, (OUTPUT_DIM, 1), jnp.float32) * 0.1
    return {"w1": w1, "b1": b1, "gamma": gamma, "beta": beta,
            "w2": w2, "b2": b2}


def _reference(x, params):
    """Pure-JAX reference of the PyTorch forward (training-mode BatchNorm)."""
    h = x @ params["w1"].T + params["b1"]
    mean = jnp.mean(h, axis=0, keepdims=True)
    var = jnp.mean((h - mean) ** 2, axis=0, keepdims=True)
    h = (h - mean) * jax.lax.rsqrt(var + BN_EPS)
    h = h * params["gamma"].T + params["beta"].T
    h = jnp.maximum(h, 0.0)
    return h @ params["w2"].T + params["b2"].T


if __name__ == "__main__":
    key = jax.random.PRNGKey(0)
    kx, kp = jax.random.split(key)

    B = 512                                # 4 batch tiles of 128 -> exercises the grid
    x = jax.random.normal(kx, (B, INPUT_DIM), jnp.float32)
    params = init_params(kp)

    out = jax.block_until_ready(stronger_meta_ann(x, params, block_b=128))

    ref = _reference(x, params)
    assert out.shape == (B, OUTPUT_DIM)
    assert jnp.allclose(out, ref, atol=1e-3, rtol=1e-3), "mismatch vs reference"

    print("KERNEL_OK")
</pallas_src>

<mosaic_0001>
module attributes {stable_mosaic.version = 11 : i64} {
  func.func @_bn_stats_kernel(%arg0: i32, %arg1: memref<27x128xf32, #tpu.memory_space<vmem>>, %arg2: memref<32x27xf32, #tpu.memory_space<vmem>>, %arg3: memref<32x1xf32, #tpu.memory_space<vmem>>, %arg4: memref<32x1xf32, #tpu.memory_space<vmem>>, %arg5: memref<32x1xf32, #tpu.memory_space<vmem>>, %arg6: memref<32x1xf32, #tpu.memory_space<vmem>>, %arg7: memref<32x1xf32, #tpu.memory_space<vmem>>, %arg8: memref<32x1xf32, #tpu.memory_space<vmem>>) attributes {dimension_semantics = [#tpu.dimension_semantics<arbitrary>], iteration_bounds = array<i64: 4>, scalar_prefetch = 0 : i64, scratch_operands = 2 : i64, tpu.core_type = #tpu.core_type<tc>, window_params = [{transform_indices = @transform_0, window_bounds = array<i64: 27, 128>}, {pipeline_mode = #tpu.pipeline_mode<synchronous>, transform_indices = @transform_1, window_bounds = array<i64: 32, 27>}, {pipeline_mode = #tpu.pipeline_mode<synchronous>, transform_indices = @transform_2, window_bounds = array<i64: 32, 1>}, {pipeline_mode = #tpu.pipeline_mode<synchronous>, transform_indices = @transform_3, window_bounds = array<i64: 32, 1>}, {pipeline_mode = #tpu.pipeline_mode<synchronous>, transform_indices = @transform_4, window_bounds = array<i64: 32, 1>}, {pipeline_mode = #tpu.pipeline_mode<synchronous>, transform_indices = @transform_5, window_bounds = array<i64: 32, 1>}]} {
    %c0_i32 = arith.constant 0 : i32
    %0 = arith.cmpi eq, %arg0, %c0_i32 : i32
    %1 = arith.extui %0 : i1 to i32
    %c0_i32_0 = arith.constant 0 : i32
    %2 = arith.cmpi ne, %1, %c0_i32_0 : i32
    scf.if %2 {
      %cst_15 = arith.constant 0.000000e+00 : f32
      %20 = vector.broadcast %cst_15 : f32 to vector<32x1xf32>
      %c0_16 = arith.constant 0 : index
      %c0_17 = arith.constant 0 : index
      %21 = vector.load %arg7[%c0_16, %c0_17] : memref<32x1xf32, #tpu.memory_space<vmem>>, vector<32x1xf32>
      tpu.vector_store %arg7[%c0_16, %c0_17], %20 {strides = array<i32>} : memref<32x1xf32, #tpu.memory_space<vmem>>, vector<32x1xf32>,
      %cst_18 = arith.constant 0.000000e+00 : f32
      %22 = vector.broadcast %cst_18 : f32 to vector<32x1xf32>
      %c0_19 = arith.constant 0 : index
      %c0_20 = arith.constant 0 : index
      %23 = vector.load %arg8[%c0_19, %c0_20] : memref<32x1xf32, #tpu.memory_space<vmem>>, vector<32x1xf32>
      tpu.vector_store %arg8[%c0_19, %c0_20], %22 {strides = array<i32>} : memref<32x1xf32, #tpu.memory_space<vmem>>, vector<32x1xf32>,
    } else {
    }
    %c0 = arith.constant 0 : index
    %c0_1 = arith.constant 0 : index
    %3 = vector.load %arg2[%c0, %c0_1] : memref<32x27xf32, #tpu.memory_space<vmem>>, vector<32x27xf32>
    %c0_2 = arith.constant 0 : index
    %c0_3 = arith.constant 0 : index
    %4 = vector.load %arg1[%c0_2, %c0_3] : memref<27x128xf32, #tpu.memory_space<vmem>>, vector<27x128xf32>
    %cst = arith.constant dense<0.000000e+00> : vector<32x128xf32>
    %5 = tpu.matmul %3, %4, %cst {dimension_numbers = #tpu.dot_dimension_numbers<[1], [0], [0], [1], [0, 0, 1, 1], [], []>} : vector<32x27xf32>, vector<27x128xf32>, vector<32x128xf32> -> vector<32x128xf32>
    %c0_4 = arith.constant 0 : index
    %c0_5 = arith.constant 0 : index
    %6 = vector.load %arg7[%c0_4, %c0_5] : memref<32x1xf32, #tpu.memory_space<vmem>>, vector<32x1xf32>
    %cst_6 = arith.constant dense<0.000000e+00> : vector<32xf32>
    %7 = vector.multi_reduction <add>, %5, %cst_6 [1] : vector<32x128xf32> to vector<32xf32>
    %8 = vector.shape_cast %7 : vector<32xf32> to vector<32x1xf32>
    %9 = arith.addf %6, %8 : vector<32x1xf32>
    %c0_7 = arith.constant 0 : index
    %c0_8 = arith.constant 0 : index
    %10 = vector.load %arg7[%c0_7, %c0_8] : memref<32x1xf32, #tpu.memory_space<vmem>>, vector<32x1xf32>
    tpu.vector_store %arg7[%c0_7, %c0_8], %9 {strides = array<i32>} : memref<32x1xf32, #tpu.memory_space<vmem>>, vector<32x1xf32>,
    %c0_9 = arith.constant 0 : index
    %c0_10 = arith.constant 0 : index
    %11 = vector.load %arg8[%c0_9, %c0_10] : memref<32x1xf32, #tpu.memory_space<vmem>>, vector<32x1xf32>
    %12 = arith.mulf %5, %5 : vector<32x128xf32>
    %cst_11 = arith.constant dense<0.000000e+00> : vector<32xf32>
    %13 = vector.multi_reduction <add>, %12, %cst_11 [1] : vector<32x128xf32> to vector<32xf32>
    %14 = vector.shape_cast %13 : vector<32xf32> to vector<32x1xf32>
    %15 = arith.addf %11, %14 : vector<32x1xf32>
    %c0_12 = arith.constant 0 : index
    %c0_13 = arith.constant 0 : index
    %16 = vector.load %arg8[%c0_12, %c0_13] : memref<32x1xf32, #tpu.memory_space<vmem>>, vector<32x1xf32>
    tpu.vector_store %arg8[%c0_12, %c0_13], %15 {strides = array<i32>} : memref<32x1xf32, #tpu.memory_space<vmem>>, vector<32x1xf32>,
    %c3_i32 = arith.constant 3 : i32
    %17 = arith.cmpi eq, %arg0, %c3_i32 : i32
    %18 = arith.extui %17 : i1 to i32
    %c0_i32_14 = arith.constant 0 : i32
    %19 = arith.cmpi ne, %18, %c0_i32_14 : i32
    scf.if %19 {
      %c0_15 = arith.constant 0 : index
      %c0_16 = arith.constant 0 : index
      %20 = vector.load %arg7[%c0_15, %c0_16] : memref<32x1xf32, #tpu.memory_space<vmem>>, vector<32x1xf32>
      %cst_17 = arith.constant 0.001953125 : f32
      %21 = vector.broadcast %cst_17 : f32 to vector<32x1xf32>
      %22 = arith.mulf %20, %21 : vector<32x1xf32>
      %c0_18 = arith.constant 0 : index
      %c0_19 = arith.constant 0 : index
      %23 = vector.load %arg8[%c0_18, %c0_19] : memref<32x1xf32, #tpu.memory_space<vmem>>, vector<32x1xf32>
      %cst_20 = arith.constant 0.001953125 : f32
      %24 = vector.broadcast %cst_20 : f32 to vector<32x1xf32>
      %25 = arith.mulf %23, %24 : vector<32x1xf32>
      %26 = arith.mulf %22, %22 : vector<32x1xf32>
      %27 = arith.subf %25, %26 : vector<32x1xf32>
      %c0_21 = arith.constant 0 : index
      %c0_22 = arith.constant 0 : index
      %28 = vector.load %arg3[%c0_21, %c0_22] : memref<32x1xf32, #tpu.memory_space<vmem>>, vector<32x1xf32>
      %cst_23 = arith.constant 9.99999974E-6 : f32
      %29 = vector.broadcast %cst_23 : f32 to vector<32x1xf32>
      %30 = arith.addf %27, %29 : vector<32x1xf32>
      %31 = math.rsqrt %30 : vector<32x1xf32>
      %32 = arith.mulf %28, %31 : vector<32x1xf32>
      %c0_24 = arith.constant 0 : index
      %c0_25 = arith.constant 0 : index
      %33 = vector.load %arg5[%c0_24, %c0_25] : memref<32x1xf32, #tpu.memory_space<vmem>>, vector<32x1xf32>
      tpu.vector_store %arg5[%c0_24, %c0_25], %32 {strides = array<i32>} : memref<32x1xf32, #tpu.memory_space<vmem>>, vector<32x1xf32>,
      %c0_26 = arith.constant 0 : index
      %c0_27 = arith.constant 0 : index
      %34 = vector.load %arg4[%c0_26, %c0_27] : memref<32x1xf32, #tpu.memory_space<vmem>>, vector<32x1xf32>
      %35 = arith.mulf %22, %32 : vector<32x1xf32>
      %36 = arith.subf %34, %35 : vector<32x1xf32>
      %c0_28 = arith.constant 0 : index
      %c0_29 = arith.constant 0 : index
      %37 = vector.load %arg6[%c0_28, %c0_29] : memref<32x1xf32, #tpu.memory_space<vmem>>, vector<32x1xf32>
      tpu.vector_store %arg6[%c0_28, %c0_29], %36 {strides = array<i32>} : memref<32x1xf32, #tpu.memory_space<vmem>>, vector<32x1xf32>,
    } else {
    }
    return
  }
  func.func @transform_0(%arg0: i32) -> (i32, i32) {
    %c0_i32 = arith.constant 0 : i32
    %c0_i32_0 = arith.constant 0 : i32
    return %c0_i32, %arg0 : i32, i32
  }
  func.func @transform_1(%arg0: i32) -> (i32, i32) {
    %c0_i32 = arith.constant 0 : i32
    %c0_i32_0 = arith.constant 0 : i32
    %c0_i32_1 = arith.constant 0 : i32
    return %c0_i32, %c0_i32_0 : i32, i32
  }
  func.func @transform_2(%arg0: i32) -> (i32, i32) {
    %c0_i32 = arith.constant 0 : i32
    %c0_i32_0 = arith.constant 0 : i32
    %c0_i32_1 = arith.constant 0 : i32
    return %c0_i32, %c0_i32_0 : i32, i32
  }
  func.func @transform_3(%arg0: i32) -> (i32, i32) {
    %c0_i32 = arith.constant 0 : i32
    %c0_i32_0 = arith.constant 0 : i32
    %c0_i32_1 = arith.constant 0 : i32
    return %c0_i32, %c0_i32_0 : i32, i32
  }
  func.func @transform_4(%arg0: i32) -> (i32, i32) {
    %c0_i32 = arith.constant 0 : i32
    %c0_i32_0 = arith.constant 0 : i32
    %c0_i32_1 = arith.constant 0 : i32
    return %c0_i32, %c0_i32_0 : i32, i32
  }
  func.func @transform_5(%arg0: i32) -> (i32, i32) {
    %c0_i32 = arith.constant 0 : i32
    %c0_i32_0 = arith.constant 0 : i32
    %c0_i32_1 = arith.constant 0 : i32
    return %c0_i32, %c0_i32_0 : i32, i32
  }
}

</mosaic_0001>

<llo_original>
// kernel: tpu_custom_call.1
$region0: #{tpu_custom_call.1}
  #allocation0 [shape = 'u32[]', space=smem, size = 0x4, offset = 0x4, fixed_abs, tag = 'smem constant byte address 0x4 - core index']
  #allocation1 [shape = 'u32[144,128]{1,0:T(1,128)}', space=vmem, size = 0x12000, scoped, tag = 'internal scratch']
  #allocation2 [shape = 'f32[32,1]{1,0:T(8,128)}', space=vmem, size = 0x4000, scoped, tag = 'scratch operand']
  #allocation3 [shape = 'f32[32,1]{1,0:T(8,128)}', space=vmem, size = 0x4000, scoped, tag = 'scratch operand']
  %s0 = inlined_call_operand.hbm [shape: f32[27,512], index: 0, kind: input, shape index: {}]
  %s1 = inlined_call_operand.vmem [shape: f32[32,27], index: 1, kind: input, shape index: {}]
  %s2 = inlined_call_operand.vmem [shape: f32[32,1], index: 2, kind: input, shape index: {}]
  %s3 = inlined_call_operand.vmem [shape: f32[32,1], index: 3, kind: input, shape index: {}]
  %s4 = inlined_call_operand.vmem [shape: f32[32,1], index: 4, kind: output, shape index: {0}]
  %s5 = inlined_call_operand.vmem [shape: f32[32,1], index: 5, kind: output, shape index: {1}]
  %6 = xla_tuple %s4, %s5
  %s7 = sld [smem:[#allocation0]]
  $region69: #{tpu_custom_call.1} parent=0
    _
  %s9 = ssub.s32 1, %s7
  %s10 = scalar_select 0, %s9, %s7
  $region1: #{tpu_custom_call.1} parent=0
    #allocation4 [shape = 'u8[32768]{0}', space=vmem, size = 0x8000, scoped, tag = 'input window, operand 0']
    #allocation5 [shape = 's32[2]{0}', space=sflag, size = 0x8, scoped, tag = 'scoped memory for tpu_custom_call.1']
    %11 = vsyncpa [#allocation5], 0
    %s12 = scalar_lea.sflag [#allocation5], 1
    %13 = vsyncpa %s12, 0
    loop: start=0, step=1, limit=6
    $region2: #{tpu_custom_call.1} parent=1 // loop_pre_header
      _
    $region3: #{tpu_custom_call.1} parent=1 // loop_header
      %s15 = sphi 0, %s19
      %p16 = scmp.ge.s32.totalorder %s15, 6
      %s25 = sphi 0, %s27
      %s28 = sphi 0, %s25
      %s29 = sphi 0, %s28
      %s45 = sphi 0, %s29
      %s49 = sphi 0, %s49
      %s51 = sphi 0, %s49
      %s52 = sphi 0, %s51
      %s66 = sphi 0, %s52
      %s70 = sphi 0, %s70
      %s72 = sphi 0, %s70
      %s73 = sphi 0, %s72
      %s87 = sphi 0, %s73
      %s91 = sphi 0, %s91
      %s93 = sphi 0, %s91
      %s94 = sphi 0, %s93
      %s108 = sphi 0, %s94
      %s112 = sphi 0, %s112
      %s114 = sphi 0, %s112
      %s115 = sphi 0, %s114
      %s129 = sphi 0, %s115
      %s133 = sphi 0, %s133
      %s135 = sphi 0, %s133
      %s136 = sphi 0, %s135
      %s150 = sphi 0, %s136
    $region4: #{tpu_custom_call.1} parent=1 // loop_header_branch
      %18 = sbr.rel (%p16) target = $region8
    $region5: #{tpu_custom_call.1} parent=1 // loop_body
      %s20 = ssub.s32 %s15, 1
      %s21 = ssub.s32 %s15, 2
      %s22 = sadd.s32 %s15, 1
      %s23 = ssub.s32 %s15, %s22
      %p24 = scmp.eq.s32.totalorder %s23, 0
      %s26 = sadd.s32 %s25, 1
      %s27 = scalar_select %p24, %s25, %s26
      %p30 = pneg %p24
      %p31 = scmp.eq.s32.totalorder %s15, 3
      %p32 = por %p30, %p31
      %p33 = scmp.ne.s32.totalorder %s25, %s28
      %p34 = scmp.eq.s32.totalorder %s15, 0
      %p35 = por %p33, %p34
      %p36 = scmp.ne.s32.totalorder %s25, %s28
      %p37 = scmp.eq.s32.totalorder %s20, 3
      %p38 = por %p36, %p37
      %p39 = scmp.ne.s32.totalorder %s28, %s29
      %p40 = scmp.eq.s32.totalorder %s20, 0
      %p41 = por %p39, %p40
      %p42 = scmp.ne.s32.totalorder %s28, %s29
      %p43 = scmp.eq.s32.totalorder %s21, 3
      %p44 = por %p42, %p43
      %p46 = scmp.ne.s32.totalorder %s29, %s45
      %p47 = scmp.eq.s32.totalorder %s21, 0
      %p48 = por %p46, %p47
      %s50 = sadd.s32 %s49, 1
      %p53 = scmp.eq.s32.totalorder %s15, 3
      %p54 = scmp.ne.s32.totalorder %s49, %s51
      %p55 = scmp.eq.s32.totalorder %s15, 0
      %p56 = por %p54, %p55
      %p57 = scmp.ne.s32.totalorder %s49, %s51
      %p58 = scmp.eq.s32.totalorder %s20, 3
      %p59 = por %p57, %p58
      %p60 = scmp.ne.s32.totalorder %s51, %s52
      %p61 = scmp.eq.s32.totalorder %s20, 0
      %p62 = por %p60, %p61
      %p63 = scmp.ne.s32.totalorder %s51, %s52
      %p64 = scmp.eq.s32.totalorder %s21, 3
      %p65 = por %p63, %p64
      %p67 = scmp.ne.s32.totalorder %s52, %s66
      %p68 = scmp.eq.s32.totalorder %s21, 0
      %p69 = por %p67, %p68
      %s71 = sadd.s32 %s70, 1
      %p74 = scmp.eq.s32.totalorder %s15, 3
      %p75 = scmp.ne.s32.totalorder %s70, %s72
      %p76 = scmp.eq.s32.totalorder %s15, 0
      %p77 = por %p75, %p76
      %p78 = scmp.ne.s32.totalorder %s70, %s72
      %p79 = scmp.eq.s32.totalorder %s20, 3
      %p80 = por %p78, %p79
      %p81 = scmp.ne.s32.totalorder %s72, %s73
      %p82 = scmp.eq.s32.totalorder %s20, 0
      %p83 = por %p81, %p82
      %p84 = scmp.ne.s32.totalorder %s72, %s73
      %p85 = scmp.eq.s32.totalorder %s21, 3
      %p86 = por %p84, %p85
      %p88 = scmp.ne.s32.totalorder %s73, %s87
      %p89 = scmp.eq.s32.totalorder %s21, 0
      %p90 = por %p88, %p89
      %s92 = sadd.s32 %s91, 1
      %p95 = scmp.eq.s32.totalorder %s15, 3
      %p96 = scmp.ne.s32.totalorder %s91, %s93
      %p97 = scmp.eq.s32.totalorder %s15, 0
      %p98 = por %p96, %p97
      %p99 = scmp.ne.s32.totalorder %s91, %s93
      %p100 = scmp.eq.s32.totalorder %s20, 3
      %p101 = por %p99, %p100
      %p102 = scmp.ne.s32.totalorder %s93, %s94
      %p103 = scmp.eq.s32.totalorder %s20, 0
      %p104 = por %p102, %p103
      %p105 = scmp.ne.s32.totalorder %s93, %s94
      %p106 = scmp.eq.s32.totalorder %s21, 3
      %p107 = por %p105, %p106
      %p109 = scmp.ne.s32.totalorder %s94, %s108
      %p110 = scmp.eq.s32.totalorder %s21, 0
      %p111 = por %p109, %p110
      %s113 = sadd.s32 %s112, 1
      %p116 = scmp.eq.s32.totalorder %s15, 3
      %p117 = scmp.ne.s32.totalorder %s112, %s114
      %p118 = scmp.eq.s32.totalorder %s15, 0
      %p119 = por %p117, %p118
      %p120 = scmp.ne.s32.totalorder %s112, %s114
      %p121 = scmp.eq.s32.totalorder %s20, 3
      %p122 = por %p120, %p121
      %p123 = scmp.ne.s32.totalorder %s114, %s115
      %p124 = scmp.eq.s32.totalorder %s20, 0
      %p125 = por %p123, %p124
      %p126 = scmp.ne.s32.totalorder %s114, %s115
      %p127 = scmp.eq.s32.totalorder %s21, 3
      %p128 = por %p126, %p127
      %p130 = scmp.ne.s32.totalorder %s115, %s129
      %p131 = scmp.eq.s32.totalorder %s21, 0
      %p132 = por %p130, %p131
      %s134 = sadd.s32 %s133, 1
      %p137 = scmp.eq.s32.totalorder %s15, 3
      %p138 = scmp.ne.s32.totalorder %s133, %s135
      %p139 = scmp.eq.s32.totalorder %s15, 0
      %p140 = por %p138, %p139
      %p141 = scmp.ne.s32.totalorder %s133, %s135
      %p142 = scmp.eq.s32.totalorder %s20, 3
      %p143 = por %p141, %p142
      %p144 = scmp.ne.s32.totalorder %s135, %s136
      %p145 = scmp.eq.s32.totalorder %s20, 0
      %p146 = por %p144, %p145
      %p147 = scmp.ne.s32.totalorder %s135, %s136
      %p148 = scmp.eq.s32.totalorder %s21, 3
      %p149 = por %p147, %p148
      %p151 = scmp.ne.s32.totalorder %s136, %s150
      %p152 = scmp.eq.s32.totalorder %s21, 0
      %p153 = por %p151, %p152
      %p154 = scmp.le.s32.totalorder 1, %s15
      %p155 = scmp.lt.s32.totalorder %s15, 5
      %p156 = pnand %p154, %p155
      %p157 = pneg %p156
      // Predicated region
      $region9: #{tpu_custom_call.1} parent=5 // pred_check
        _
      $region10: #{tpu_custom_call.1} parent=5 // pred_check_branch
        %159 = sbr.rel (%p156) target = $region12
      $region11: #{tpu_custom_call.1} parent=5 // pred_region
        %s160 = ssub.s32 %s15, 1
        // Predicated region
        $region13: #{tpu_custom_call.1} parent=11 // pred_check
          %p161 = pneg %p62
        $region14: #{tpu_custom_call.1} parent=11 // pred_check_branch
          %163 = sbr.rel (%p161) target = $region16
        $region15: #{tpu_custom_call.1} parent=11 // pred_region
          _
        $region16: #{tpu_custom_call.1} parent=11 // pred_fallthru
          _
        // Predicated region
        $region17: #{tpu_custom_call.1} parent=11 // pred_check
          %p164 = pneg %p83
        $region18: #{tpu_custom_call.1} parent=11 // pred_check_branch
          %166 = sbr.rel (%p164) target = $region20
        $region19: #{tpu_custom_call.1} parent=11 // pred_region
          _
        $region20: #{tpu_custom_call.1} parent=11 // pred_fallthru
          _
        // Predicated region
        $region21: #{tpu_custom_call.1} parent=11 // pred_check
          %p167 = pneg %p104
        $region22: #{tpu_custom_call.1} parent=11 // pred_check_branch
          %169 = sbr.rel (%p167) target = $region24
        $region23: #{tpu_custom_call.1} parent=11 // pred_region
          _
        $region24: #{tpu_custom_call.1} parent=11 // pred_fallthru
          _
      $region12: #{tpu_custom_call.1} parent=5 // pred_fallthru
        _
      %p170 = scmp.lt.s32.totalorder %s15, 4
      // Predicated region
      $region25: #{tpu_custom_call.1} parent=5 // pred_check
        %p171 = pneg %p170
      $region26: #{tpu_custom_call.1} parent=5 // pred_check_branch
        %173 = sbr.rel (%p171) target = $region28
      $region27: #{tpu_custom_call.1} parent=5 // pred_region
        // Predicated region
        $region29: #{tpu_custom_call.1} parent=27 // pred_check
          %p174 = pneg %p35
        $region30: #{tpu_custom_call.1} parent=27 // pred_check_branch
          %176 = sbr.rel (%p174) target = $region32
        $region31: #{tpu_custom_call.1} parent=27 // pred_region
          %s177 = sand.u32 %s25, 1
          %s178 = scalar_lea.sflag [#allocation5], %s177
          %s179 = sand.u32 %s25, 1
          %s180 = smul.addr %s179, 32
          %s181 = scalar_lea.vmem [#allocation4], %s180
          %s183 = ssub.s32 512, 512
          %184 = vsyncadd %s178, %s183
          %s185 = smul.addr %s15, 128
          %s186 = scalar_lea.hbm %s0, %s185
          %s187 = sshll.u32 %s181, 4
          %s188 = int_to_ptr.vmem [resolvable:$true] %s187
          %193 = dma.hbm_to_vmem [thread:$0]  %s186, 512, %s188, %s178, 512, 128, 8
        $region32: #{tpu_custom_call.1} parent=27 // pred_fallthru
          _
      $region28: #{tpu_custom_call.1} parent=5 // pred_fallthru
        _
      %p194 = scmp.le.s32.totalorder 1, %s15
      %p195 = scmp.lt.s32.totalorder %s15, 5
      %p196 = pnand %p194, %p195
      %p197 = pneg %p196
      // Predicated region
      $region33: #{tpu_custom_call.1} parent=5 // pred_check
        _
      $region34: #{tpu_custom_call.1} parent=5 // pred_check_branch
        %199 = sbr.rel (%p196) target = $region36
      $region35: #{tpu_custom_call.1} parent=5 // pred_region
        %s200 = ssub.s32 %s15, 1
        %s201 = sand.u32 %s28, 1
        %s202 = scalar_lea.sflag [#allocation5], %s201
        %s203 = sand.u32 %s28, 1
        %s204 = smul.addr %s203, 32
        %s205 = scalar_lea.vmem [#allocation4], %s204
        // Predicated region
        $region37: #{tpu_custom_call.1} parent=35 // pred_check
          %p206 = pneg %p41
        $region38: #{tpu_custom_call.1} parent=35 // pred_check_branch
          %208 = sbr.rel (%p206) target = $region40
        $region39: #{tpu_custom_call.1} parent=35 // pred_region
          %209 = dma.done %s202, 512
        $region40: #{tpu_custom_call.1} parent=35 // pred_fallthru
          _
        %s210 = sand.u32 %s28, 1
        %s211 = scalar_lea.sflag [#allocation5], %s210
        %s212 = sand.u32 %s28, 1
        %s213 = smul.addr %s212, 32
        %s214 = scalar_lea.vmem [#allocation4], %s213
        %p215 = pneg %p41
        %p216 = pneg %p38
        %p217 = pneg %p62
        %p218 = pneg %p59
        %p219 = pneg %p83
        %p220 = pneg %p80
        %p221 = pneg %p104
        %p222 = pneg %p101
        %p223 = pneg %p125
        %p224 = pneg %p122
        %p225 = pneg %p146
        %p226 = pneg %p143
        %p227 = scmp.eq.s32.totalorder %s20, 0
        // Predicated region
        $region41: #{tpu_custom_call.1} parent=35 // pred_check
          %p228 = pneg %p227
        $region42: #{tpu_custom_call.1} parent=35 // pred_check_branch
          %230 = sbr.rel (%p228) target = $region44
        $region43: #{tpu_custom_call.1} parent=35 // pred_region
          %vm231 = vcmask 7168
          %232 = vst.msk [vmem:[#allocation2] sm:$0xff] %vm231, 0.0
          %233 = vst.msk [vmem:[#allocation2 + $0x8] sm:$0xff] %vm231, 0.0
          %234 = vst.msk [vmem:[#allocation2 + $0x10] sm:$0xff] %vm231, 0.0
          %235 = vst.msk [vmem:[#allocation2 + $0x18] sm:$0xff] %vm231, 0.0
          %236 = vst.msk [vmem:[#allocation3] sm:$0xff] %vm231, 0.0
          %237 = vst.msk [vmem:[#allocation3 + $0x8] sm:$0xff] %vm231, 0.0
          %238 = vst.msk [vmem:[#allocation3 + $0x10] sm:$0xff] %vm231, 0.0
          %239 = vst.msk [vmem:[#allocation3 + $0x18] sm:$0xff] %vm231, 0.0
        $region44: #{tpu_custom_call.1} parent=35 // pred_fallthru
          _
        %v240 = vld [vmem:[%s1] sm:$0xff]
        %v241 = vld [vmem:[%s1 + $0x8] sm:$0xff]
        %v242 = vld [vmem:[%s1 + $0x10] sm:$0xff]
        %v243 = vld [vmem:[%s1 + $0x18] sm:$0xff]
        %v244 = vld [vmem:[%s205] sm:$0xff]
        %v245 = vld [vmem:[%s205 + $0x8] sm:$0xff]
        %v246 = vld [vmem:[%s205 + $0x10] sm:$0xff]
        %v247 = vld [vmem:[%s205 + $0x18] sm:$0x7]
        %vm248 = vcmask 220160
        %v250 = vsel %vm248, %v240, 0
        %v253 = vsel %vm248, %v241, 0
        %v256 = vsel %vm248, %v242, 0
        %v259 = vsel %vm248, %v243, 0
        %vm261 = vcmask 1042432
        %v263 = vsel %vm261, %v247, 0
        %265 = vmatprep.subr.mxu0 0.0
        %266 = vmatpush1.msra.mxu0 0.0
        %267 = vmatprep.subr.mxu0 0.0
        %268 = vmatpush1.msra.mxu0 0.0
        %269 = vmatprep.subr.mxu0 0.0
        %270 = vmatpush1.msra.mxu0 0.0
        %271 = vmatprep.subr.mxu0 0.0
        %272 = vmatpush1.msra.mxu0 0.0
        %273 = vmatprep.subr.mxu0 0.0
        %274 = vmatpush1.msra.mxu0 0.0
        %275 = vmatprep.subr.mxu0 0.0
        %276 = vmatpush1.msra.mxu0 0.0
        %277 = vmatprep.subr.mxu0 0.0
        %278 = vmatpush1.msra.mxu0 0.0
        %279 = vmatprep.subr.mxu0 0.0
        %280 = vmatpush1.msra.mxu0 0.0
        %281 = vmatprep.subr.mxu0 0.0
        %282 = vmatpush1.msra.mxu0 0.0
        %283 = vmatprep.subr.mxu0 0.0
        %284 = vmatpush1.msra.mxu0 0.0
        %285 = vmatprep.subr.mxu0 0.0
        %286 = vmatpush1.msra.mxu0 0.0
        %287 = vmatprep.subr.mxu0 0.0
        %288 = vmatpush1.msra.mxu0 0.0
        %289 = vmatprep.subr.mxu0 0.0
        %290 = vmatpush1.msra.mxu0 %v263
        %291 = vmatprep.subr.mxu0 0.0
        %292 = vmatpush1.msra.mxu0 %v246
        %293 = vmatprep.subr.mxu0 0.0
        %294 = vmatpush1.msra.mxu0 %v245
        %295 = vmatprep.subr.mxu0 0.0
        %296 = vmatpush1.msra.mxu0 %v244
        %297 = vmatprep.subr.mxu0 0.0
        %298 = vmatpush2.msra.mxu0 0.0
        %299 = vmatprep.subr.mxu0 0.0
        %300 = vmatpush2.msra.mxu0 0.0
        %301 = vmatprep.subr.mxu0 0.0
        %302 = vmatpush2.msra.mxu0 0.0
        %303 = vmatprep.subr.mxu0 0.0
        %304 = vmatpush2.msra.mxu0 0.0
        %305 = vmatprep.subr.mxu0 0.0
        %306 = vmatpush2.msra.mxu0 0.0
        %307 = vmatprep.subr.mxu0 0.0
        %308 = vmatpush2.msra.mxu0 0.0
        %309 = vmatprep.subr.mxu0 0.0
        %310 = vmatpush2.msra.mxu0 0.0
        %311 = vmatprep.subr.mxu0 0.0
        %312 = vmatpush2.msra.mxu0 0.0
        %313 = vmatprep.subr.mxu0 0.0
        %314 = vmatpush2.msra.mxu0 0.0
        %315 = vmatprep.subr.mxu0 0.0
        %316 = vmatpush2.msra.mxu0 0.0
        %317 = vmatprep.subr.mxu0 0.0
        %318 = vmatpush2.msra.mxu0 0.0
        %319 = vmatprep.subr.mxu0 0.0
        %320 = vmatpush2.msra.mxu0 0.0
        %321 = vmatprep.subr.mxu0 0.0
        %322 = vmatpush2.msra.mxu0 0.0
        %323 = vmatprep.subr.mxu0 0.0
        %324 = vmatpush2.msra.mxu0 0.0
        %325 = vmatprep.subr.mxu0 0.0
        %326 = vmatpush2.msra.mxu0 0.0
        %327 = vmatprep.subr.mxu0 0.0
        %328 = vmatpush2.msra.mxu0 0.0
        %329 = vmatprep.mubr.f32.mxu0 0.0
        %330 = vmatmul.mubr.f32.gmra.mxu0 %v250
        %v331 = vpop.f32.mrf.mxu0
        %v332 = vadd.f32 0.0, %v331
        %v333 = vpop.f32.mrf.mxu0
        %334 = vmatprep.mubr.f32.mxu0 0.0
        %335 = vmatmul.mubr.f32.gmra.mxu0 %v253
        %v336 = vpop.f32.mrf.mxu0
        %v337 = vadd.f32 0.0, %v336
        %v338 = vpop.f32.mrf.mxu0
        %339 = vmatprep.mubr.f32.mxu0 0.0
        %340 = vmatmul.mubr.f32.gmra.mxu0 %v256
        %v341 = vpop.f32.mrf.mxu0
        %v342 = vadd.f32 0.0, %v341
        %v343 = vpop.f32.mrf.mxu0
        %344 = vmatprep.mubr.f32.mxu0 0.0
        %345 = vmatmul.mubr.f32.gmra.mxu0 %v259
        %v346 = vpop.f32.mrf.mxu0
        %v347 = vadd.f32 0.0, %v346
        %v348 = vpop.f32.mrf.mxu0
        %349 = vdwg.mxu0
        %v350 = vld [vmem:[#allocation2] sm:$0xff]
        %v351 = vld [vmem:[#allocation2 + $0x8] sm:$0xff]
        %v352 = vld [vmem:[#allocation2 + $0x10] sm:$0xff]
        %v353 = vld [vmem:[#allocation2 + $0x18] sm:$0xff]
        %354 = vadd.xlane.f32.xlu0 %v332
        %v355 = vpop.xlane.xlu0 %354
        %356 = vadd.xlane.f32.xlu0 %v337
        %v357 = vpop.xlane.xlu0 %356
        %358 = vadd.xlane.f32.xlu0 %v342
        %v359 = vpop.xlane.xlu0 %358
        %360 = vadd.xlane.f32.xlu0 %v347
        %v361 = vpop.xlane.xlu0 %360
        %v362 = vadd.f32 %v350, %v355
        %v363 = vadd.f32 %v351, %v357
        %v364 = vadd.f32 %v352, %v359
        %v365 = vadd.f32 %v353, %v361
        %vm366 = vcmask 7168
        %367 = vst.msk [vmem:[#allocation2] sm:$0xff] %vm366, %v362
        %368 = vst.msk [vmem:[#allocation2 + $0x8] sm:$0xff] %vm366, %v363
        %369 = vst.msk [vmem:[#allocation2 + $0x10] sm:$0xff] %vm366, %v364
        %370 = vst.msk [vmem:[#allocation2 + $0x18] sm:$0xff] %vm366, %v365
        %v371 = vld [vmem:[#allocation3] sm:$0xff]
        %v372 = vld [vmem:[#allocation3 + $0x8] sm:$0xff]
        %v373 = vld [vmem:[#allocation3 + $0x10] sm:$0xff]
        %v374 = vld [vmem:[#allocation3 + $0x18] sm:$0xff]
        %v375 = vmul.f32 %v332, %v332
        %v376 = vmul.f32 %v337, %v337
        %v377 = vmul.f32 %v342, %v342
        %v378 = vmul.f32 %v347, %v347
        %379 = vadd.xlane.f32.xlu0 %v375
        %v380 = vpop.xlane.xlu0 %379
        %381 = vadd.xlane.f32.xlu0 %v376
        %v382 = vpop.xlane.xlu0 %381
        %383 = vadd.xlane.f32.xlu0 %v377
        %v384 = vpop.xlane.xlu0 %383
        %385 = vadd.xlane.f32.xlu0 %v378
        %v386 = vpop.xlane.xlu0 %385
        %v387 = vadd.f32 %v371, %v380
        %v388 = vadd.f32 %v372, %v382
        %v389 = vadd.f32 %v373, %v384
        %v390 = vadd.f32 %v374, %v386
        %391 = vst.msk [vmem:[#allocation3] sm:$0xff] %vm366, %v387
        %392 = vst.msk [vmem:[#allocation3 + $0x8] sm:$0xff] %vm366, %v388
        %393 = vst.msk [vmem:[#allocation3 + $0x10] sm:$0xff] %vm366, %v389
        %394 = vst.msk [vmem:[#allocation3 + $0x18] sm:$0xff] %vm366, %v390
        %p395 = scmp.eq.s32.totalorder %s20, 3
        // Predicated region
        $region45: #{tpu_custom_call.1} parent=35 // pred_check
          %p396 = pneg %p395
        $region46: #{tpu_custom_call.1} parent=35 // pred_check_branch
          %398 = sbr.rel (%p396) target = $region48
        $region47: #{tpu_custom_call.1} parent=35 // pred_region
          %v399 = vld [vmem:[#allocation2] sm:$0xff]
          %v400 = vld [vmem:[#allocation2 + $0x8] sm:$0xff]
          %v401 = vld [vmem:[#allocation2 + $0x10] sm:$0xff]
          %v402 = vld [vmem:[#allocation2 + $0x18] sm:$0xff]
          %v403 = vmul.f32 %v399, 0.001953125
          %v404 = vmul.f32 %v400, 0.001953125
          %v405 = vmul.f32 %v401, 0.001953125
          %v406 = vmul.f32 %v402, 0.001953125
          %v407 = vld [vmem:[#allocation3] sm:$0xff]
          %v408 = vld [vmem:[#allocation3 + $0x8] sm:$0xff]
          %v409 = vld [vmem:[#allocation3 + $0x10] sm:$0xff]
          %v410 = vld [vmem:[#allocation3 + $0x18] sm:$0xff]
          %v411 = vmul.f32 %v407, 0.001953125
          %v412 = vmul.f32 %v408, 0.001953125
          %v413 = vmul.f32 %v409, 0.001953125
          %v414 = vmul.f32 %v410, 0.001953125
          %v415 = vmul.f32 %v403, %v403
          %v416 = vmul.f32 %v404, %v404
          %v417 = vmul.f32 %v405, %v405
          %v418 = vmul.f32 %v406, %v406
          %v419 = vsub.f32 %v411, %v415
          %v420 = vsub.f32 %v412, %v416
          %v421 = vsub.f32 %v413, %v417
          %v422 = vsub.f32 %v414, %v418
          %v423 = vld [vmem:[%s2] sm:$0xff]
          %v424 = vld [vmem:[%s2 + $0x8] sm:$0xff]
          %v425 = vld [vmem:[%s2 + $0x10] sm:$0xff]
          %v426 = vld [vmem:[%s2 + $0x18] sm:$0xff]
          %v427 = vadd.f32 %v419, 1e-05
          %v428 = vadd.f32 %v420, 1e-05
          %v429 = vadd.f32 %v421, 1e-05
          %v430 = vadd.f32 %v422, 1e-05
          %v431 = vrsqrt.pop %v427
          %v432 = vrsqrt.pop %v428
          %v433 = vrsqrt.pop %v429
          %v434 = vrsqrt.pop %v430
          %v435 = vmul.f32 %v423, %v431
          %v436 = vmul.f32 %v424, %v432
          %v437 = vmul.f32 %v425, %v433
          %v438 = vmul.f32 %v426, %v434
          %439 = vst.msk [vmem:[%s4] sm:$0xff] %vm366, %v435
          %440 = vst.msk [vmem:[%s4 + $0x8] sm:$0xff] %vm366, %v436
          %441 = vst.msk [vmem:[%s4 + $0x10] sm:$0xff] %vm366, %v437
          %442 = vst.msk [vmem:[%s4 + $0x18] sm:$0xff] %vm366, %v438
          %v443 = vld [vmem:[%s3] sm:$0xff]
          %v444 = vld [vmem:[%s3 + $0x8] sm:$0xff]
          %v445 = vld [vmem:[%s3 + $0x10] sm:$0xff]
          %v446 = vld [vmem:[%s3 + $0x18] sm:$0xff]
          %v447 = vmul.f32 %v403, %v435
          %v448 = vmul.f32 %v404, %v436
          %v449 = vmul.f32 %v405, %v437
          %v450 = vmul.f32 %v406, %v438
          %v451 = vsub.f32 %v443, %v447
          %v452 = vsub.f32 %v444, %v448
          %v453 = vsub.f32 %v445, %v449
          %v454 = vsub.f32 %v446, %v450
          %455 = vst.msk [vmem:[%s5] sm:$0xff] %vm366, %v451
          %456 = vst.msk [vmem:[%s5 + $0x8] sm:$0xff] %vm366, %v452
          %457 = vst.msk [vmem:[%s5 + $0x10] sm:$0xff] %vm366, %v453
          %458 = vst.msk [vmem:[%s5 + $0x18] sm:$0xff] %vm366, %v454
        $region48: #{tpu_custom_call.1} parent=35 // pred_fallthru
          _
        // Predicated region
        $region49: #{tpu_custom_call.1} parent=35 // pred_check
          %p459 = pneg %p122
        $region50: #{tpu_custom_call.1} parent=35 // pred_check_branch
          %461 = sbr.rel (%p459) target = $region52
        $region51: #{tpu_custom_call.1} parent=35 // pred_region
          _
        $region52: #{tpu_custom_call.1} parent=35 // pred_fallthru
          _
        // Predicated region
        $region53: #{tpu_custom_call.1} parent=35 // pred_check
          %p462 = pneg %p143
        $region54: #{tpu_custom_call.1} parent=35 // pred_check_branch
          %464 = sbr.rel (%p462) target = $region56
        $region55: #{tpu_custom_call.1} parent=35 // pred_region
          _
        $region56: #{tpu_custom_call.1} parent=35 // pred_fallthru
          _
        // Predicated region
        $region57: #{tpu_custom_call.1} parent=35 // pred_check
          %p465 = pneg %p122
        $region58: #{tpu_custom_call.1} parent=35 // pred_check_branch
          %467 = sbr.rel (%p465) target = $region60
        $region59: #{tpu_custom_call.1} parent=35 // pred_region
          _
        $region60: #{tpu_custom_call.1} parent=35 // pred_fallthru
          _
        // Predicated region
        $region61: #{tpu_custom_call.1} parent=35 // pred_check
          %p468 = pneg %p143
        $region62: #{tpu_custom_call.1} parent=35 // pred_check_branch
          %470 = sbr.rel (%p468) target = $region64
        $region63: #{tpu_custom_call.1} parent=35 // pred_region
          _
        $region64: #{tpu_custom_call.1} parent=35 // pred_fallthru
          _
      $region36: #{tpu_custom_call.1} parent=5 // pred_fallthru
        _
      %p471 = scmp.le.s32.totalorder 2, %s15
      // Predicated region
      $region65: #{tpu_custom_call.1} parent=5 // pred_check
        %p472 = pneg %p471
      $region66: #{tpu_custom_call.1} parent=5 // pred_check_branch
        %474 = sbr.rel (%p472) target = $region68
      $region67: #{tpu_custom_call.1} parent=5 // pred_region
        %s475 = ssub.s32 %s15, 2
      $region68: #{tpu_custom_call.1} parent=5 // pred_fallthru
        _
    $region6: #{tpu_custom_call.1} parent=1 // loop_footer
      %s19 = sadd.s32 1, %s15
    $region7: #{tpu_custom_call.1} parent=1 // loop_footer_branch
      %14 = sbr.rel target = $region3
    $region8: #{tpu_custom_call.1} parent=1 // loop_exit
      _
    %476 = vsyncpa [#allocation5], 1
    %s477 = scalar_lea.sflag [#allocation5], 1
    %478 = vsyncpa %s477, 1

</llo_original>
